<compile_context>
chip_gen: v5e
topology: v5e:2x2
jax: 0.10.0
libtpu: 0.0.40
codegen_flags: <defaults>
</compile_context>

<pallas_src>
import functools

import jax
import jax.numpy as jnp
from jax.experimental import pallas as pl
from jax.experimental.pallas import tpu as pltpu


def _parampool_kernel(*refs, has_bias):
    # refs: w_ref (1,C,1), x_ref (TB,C,ST), [bias_ref (1,ST)], o_ref (TB,C),
    #       m_sc (TB,1), l_sc (TB,1), acc_sc (TB,C)
    if has_bias:
        w_ref, x_ref, bias_ref, o_ref, m_sc, l_sc, acc_sc = refs
    else:
        w_ref, x_ref, o_ref, m_sc, l_sc, acc_sc = refs
        bias_ref = None

    s_step = pl.program_id(1)
    n_s = pl.num_programs(1)

    @pl.when(s_step == 0)
    def _init():
        m_sc[...] = jnp.full_like(m_sc, -jnp.inf)
        l_sc[...] = jnp.zeros_like(l_sc)
        acc_sc[...] = jnp.zeros_like(acc_sc)

    x = x_ref[...]                                   # (TB, C, ST), native dtype
    w = w_ref[...]                                   # (1, C, 1) f32, C on sublanes
    if x.dtype != jnp.float32:
        w = w.astype(x.dtype)                        # tiny cast; keeps the product slab
                                                     # in the input dtype

    # 1x1 conv == per-pixel channel dot product.  VPU broadcast-multiply +
    # sublane (channel) reduction with f32 accumulation — no f32 slab copy,
    # no 1-row MXU matvec.
    logits = jnp.sum(x * w, axis=1, dtype=jnp.float32)          # (TB, ST) f32

    if bias_ref is not None:
        # ragged last spatial tile: precomputed 0 / -inf bias row (zeros on all
        # other tiles) — one broadcast add instead of iota+compare+select.
        logits = logits + bias_ref[...]

    # online softmax + weighted pooling (flash-attention style)
    m_prev = m_sc[...]                                           # (TB, 1)
    m_new = jnp.maximum(m_prev, jnp.max(logits, axis=-1, keepdims=True))
    alpha = jnp.exp(m_prev - m_new)                              # (TB, 1)
    e = jnp.exp(logits - m_new)                                  # (TB, ST) f32
    l_sc[...] = alpha * l_sc[...] + jnp.sum(e, axis=-1, keepdims=True)

    if x.dtype == jnp.float32:
        xe = x * e[:, None, :]
    else:
        # keep the (TB,C,ST) multiply in the input dtype, accumulate in f32.
        # TODO(synk): for bf16 inputs needing strict <=1e-5 accuracy, multiply
        # bf16 x by f32 e instead (costs an f32 product slab).
        xe = x * e[:, None, :].astype(x.dtype)
    acc_sc[...] = alpha * acc_sc[...] + jnp.sum(xe, axis=-1, dtype=jnp.float32)
    m_sc[...] = m_new

    @pl.when(s_step == n_s - 1)
    def _finalize():
        # Exact normalize on the tiny (TB, C) accumulator — essentially free.
        o_ref[...] = (acc_sc[...] / l_sc[...]).astype(o_ref.dtype)


def parampool_forward(x_nchw, conv_weight):
    """x_nchw: (B, C, H, W); conv_weight: (1, C, 1, 1) as in nn.Conv2d(C, 1, 1, bias=False)."""
    B, C, H, W = x_nchw.shape
    S = H * W
    dtype = x_nchw.dtype
    itemsize = jnp.dtype(dtype).itemsize

    x_flat = x_nchw.reshape(B, C, S)                       # glue reshape in plain JAX
    # Pre-shape host-side so C sits on the sublane axis inside the kernel.
    w3 = conv_weight.reshape(1, C, 1).astype(jnp.float32)

    # ---- tiling -------------------------------------------------------------
    # HBM-bandwidth bound: target ~4 MiB input tiles per grid step (2-4 MiB is
    # the sweet spot on v7x's 64 MiB VMEM; v5e/v6e with 128 MiB can go larger).
    # Keep TB a multiple of 8 (sublane-dense softmax path + output blocks)
    # whenever TB < B; shrink ST instead of letting TB collapse to 1.
    TILE_TARGET = 4 << 20
    bytes_per_b = C * S * itemsize
    tb_min = 8 if B >= 8 else B

    if tb_min * bytes_per_b <= TILE_TARGET:
        # whole spatial extent fits: single spatial step
        ST = S
        TB = min(B, max(tb_min, TILE_TARGET // max(bytes_per_b, 1)))
        if TB < B:
            TB = max(8, (TB // 8) * 8)                     # sublane-dense output blocks
    else:
        # spatial tiling with streaming softmax
        TB = tb_min
        st_budget = TILE_TARGET // (TB * C * itemsize)
        ST = max(128, (st_budget // 128) * 128)
        if ST < 512 and TB * C * 512 * itemsize <= 2 * TILE_TARGET:
            ST = 512                                       # >= 2 KiB per strided DMA row
        if ST >= S:
            ST = S

    # v7x megacore: keep >= 2 steps on the parallel batch axis when the halved
    # tile is still >= 2 MiB (and stays a multiple of 8).
    if -(-B // TB) < 2 and B >= 16:
        half = ((B // 2) // 8) * 8
        if half >= 8 and half * C * ST * itemsize >= (2 << 20):
            TB = half

    S_pad = -(-S // ST) * ST
    B_pad = -(-B // TB) * TB
    ragged = S_pad != S

    if (B_pad - B) or (S_pad - S):
        # zero padding is safe: padded batch rows are sliced off; padded spatial
        # columns are neutralized with the -inf bias row before the softmax.
        x_flat = jnp.pad(x_flat, ((0, B_pad - B), (0, 0), (0, S_pad - S)))

    grid = (B_pad // TB, S_pad // ST)

    in_specs = [
        pl.BlockSpec((1, C, 1), lambda b, s: (0, 0, 0)),           # resident weight
        pl.BlockSpec((TB, C, ST), lambda b, s: (b, 0, s)),
    ]
    args = [w3, x_flat]
    if ragged:
        col = jnp.arange(S_pad, dtype=jnp.int32)
        bias = jnp.where(col < S, 0.0, -jnp.inf).astype(jnp.float32)[None, :]
        in_specs.append(pl.BlockSpec((1, ST), lambda b, s: (0, s)))
        args.append(bias)

    kernel = functools.partial(_parampool_kernel, has_bias=ragged)

    out = pl.pallas_call(
        kernel,
        out_shape=jax.ShapeDtypeStruct((B_pad, C), dtype),
        grid_spec=pltpu.PrefetchScalarGridSpec(
            num_scalar_prefetch=0,
            grid=grid,
            in_specs=in_specs,
            out_specs=pl.BlockSpec((TB, C), lambda b, s: (b, 0)),
            scratch_shapes=[
                pltpu.VMEM((TB, 1), jnp.float32),    # running max
                pltpu.VMEM((TB, 1), jnp.float32),    # running denom
                pltpu.VMEM((TB, C), jnp.float32),    # running weighted accumulator
            ],
        ),
        compiler_params=pltpu.CompilerParams(
            dimension_semantics=("parallel", "arbitrary"),
            # 48 MiB fits all gens: inside v7x's 64 MiB physical VMEM, and well
            # above the too-small v5e/v6e default scoped limits.
            vmem_limit_bytes=48 << 20,
        ),
        cost_estimate=pl.CostEstimate(
            flops=int(4 * B * C * S),
            transcendentals=int(B * S),
            bytes_accessed=int(B * C * S * itemsize + B * C * itemsize + C * 4),
        ),
    )(*args)
    return out[:B]


def parampool_reference(x_nchw, conv_weight):
    """Pure-JAX reference matching the PyTorch forward exactly."""
    B, C, H, W = x_nchw.shape
    logits = jnp.einsum("oc,bchw->bohw", conv_weight.reshape(1, C), x_nchw)  # (B,1,H,W)
    p = jax.nn.softmax(logits.reshape(B, 1, -1), axis=2).reshape(B, 1, H, W)
    return (x_nchw * p).sum(axis=3).sum(axis=2)                              # (B, C)


if __name__ == "__main__":
    key = jax.random.PRNGKey(0)
    k_x, k_w = jax.random.split(key)

    B, C, H, W = 2, 4, 16, 16
    x = jax.random.normal(k_x, (B, C, H, W), dtype=jnp.float32)

    # Deterministic init of the 1x1 conv weight (shape (1, C, 1, 1), no bias).
    bound = 1.0 / (C ** 0.5)
    conv_weight = jax.random.uniform(
        k_w, (1, C, 1, 1), minval=-bound, maxval=bound, dtype=jnp.float32)

    out = parampool_forward(x, conv_weight)
    out = jax.block_until_ready(out)

    ref = parampool_reference(x, conv_weight)
    assert out.shape == (B, C)
    assert jnp.allclose(out, ref, atol=1e-5, rtol=1e-5), (out, ref)

    print("KERNEL_OK")
</pallas_src>

<mosaic_0001>
module attributes {stable_mosaic.version = 11 : i64} {
  func.func @_parampool_kernel(%arg0: i32, %arg1: i32, %arg2: memref<1x4x1xf32, #tpu.memory_space<vmem>>, %arg3: memref<2x4x256xf32, #tpu.memory_space<vmem>>, %arg4: memref<2x4xf32, #tpu.memory_space<vmem>>, %arg5: memref<2x1xf32, #tpu.memory_space<vmem>>, %arg6: memref<2x1xf32, #tpu.memory_space<vmem>>, %arg7: memref<2x4xf32, #tpu.memory_space<vmem>>) attributes {dimension_semantics = [#tpu.dimension_semantics<parallel>, #tpu.dimension_semantics<arbitrary>], iteration_bounds = array<i64: 1, 1>, scalar_prefetch = 0 : i64, scratch_operands = 3 : i64, tpu.core_type = #tpu.core_type<tc>, window_params = [{pipeline_mode = #tpu.pipeline_mode<synchronous>, transform_indices = @transform_0, window_bounds = array<i64: 1, 4, 1>}, {transform_indices = @transform_1, window_bounds = array<i64: 2, 4, 256>}, {transform_indices = @transform_2, window_bounds = array<i64: 2, 4>}]} {
    %c0_i32 = arith.constant 0 : i32
    %0 = arith.cmpi eq, %arg1, %c0_i32 : i32
    %1 = arith.extui %0 : i1 to i32
    %c0_i32_0 = arith.constant 0 : i32
    %2 = arith.cmpi ne, %1, %c0_i32_0 : i32
    scf.if %2 {
      %cst_23 = arith.constant 0xFF800000 : f32
      %36 = vector.broadcast %cst_23 : f32 to vector<2x1xf32>
      %c0_24 = arith.constant 0 : index
      %c0_25 = arith.constant 0 : index
      %37 = vector.load %arg5[%c0_24, %c0_25] : memref<2x1xf32, #tpu.memory_space<vmem>>, vector<2x1xf32>
      tpu.vector_store %arg5[%c0_24, %c0_25], %36 {strides = array<i32>} : memref<2x1xf32, #tpu.memory_space<vmem>>, vector<2x1xf32>,
      %cst_26 = arith.constant 0.000000e+00 : f32
      %38 = vector.broadcast %cst_26 : f32 to vector<2x1xf32>
      %c0_27 = arith.constant 0 : index
      %c0_28 = arith.constant 0 : index
      %39 = vector.load %arg6[%c0_27, %c0_28] : memref<2x1xf32, #tpu.memory_space<vmem>>, vector<2x1xf32>
      tpu.vector_store %arg6[%c0_27, %c0_28], %38 {strides = array<i32>} : memref<2x1xf32, #tpu.memory_space<vmem>>, vector<2x1xf32>,
      %cst_29 = arith.constant 0.000000e+00 : f32
      %40 = vector.broadcast %cst_29 : f32 to vector<2x4xf32>
      %c0_30 = arith.constant 0 : index
      %c0_31 = arith.constant 0 : index
      %41 = vector.load %arg7[%c0_30, %c0_31] : memref<2x4xf32, #tpu.memory_space<vmem>>, vector<2x4xf32>
      tpu.vector_store %arg7[%c0_30, %c0_31], %40 {strides = array<i32>} : memref<2x4xf32, #tpu.memory_space<vmem>>, vector<2x4xf32>,
    } else {
    }
    %c0 = arith.constant 0 : index
    %c0_1 = arith.constant 0 : index
    %c0_2 = arith.constant 0 : index
    %3 = vector.load %arg3[%c0, %c0_1, %c0_2] : memref<2x4x256xf32, #tpu.memory_space<vmem>>, vector<2x4x256xf32>
    %c0_3 = arith.constant 0 : index
    %c0_4 = arith.constant 0 : index
    %c0_5 = arith.constant 0 : index
    %4 = vector.load %arg2[%c0_3, %c0_4, %c0_5] : memref<1x4x1xf32, #tpu.memory_space<vmem>>, vector<1x4x1xf32>
    %5 = vector.broadcast %4 : vector<1x4x1xf32> to vector<2x4x256xf32>
    %6 = arith.mulf %3, %5 : vector<2x4x256xf32>
    %cst = arith.constant dense<0.000000e+00> : vector<2x256xf32>
    %7 = vector.multi_reduction <add>, %6, %cst [1] : vector<2x4x256xf32> to vector<2x256xf32>
    %c0_6 = arith.constant 0 : index
    %c0_7 = arith.constant 0 : index
    %8 = vector.load %arg5[%c0_6, %c0_7] : memref<2x1xf32, #tpu.memory_space<vmem>>, vector<2x1xf32>
    %cst_8 = arith.constant dense<0xFF800000> : vector<2xf32>
    %9 = vector.multi_reduction <maximumf>, %7, %cst_8 [1] : vector<2x256xf32> to vector<2xf32>
    %10 = vector.shape_cast %9 : vector<2xf32> to vector<2x1xf32>
    %11 = arith.maximumf %8, %10 : vector<2x1xf32>
    %12 = arith.subf %8, %11 : vector<2x1xf32>
    %13 = math.exp %12 : vector<2x1xf32>
    %14 = vector.broadcast %11 : vector<2x1xf32> to vector<2x256xf32>
    %15 = arith.subf %7, %14 : vector<2x256xf32>
    %16 = math.exp %15 : vector<2x256xf32>
    %c0_9 = arith.constant 0 : index
    %c0_10 = arith.constant 0 : index
    %17 = vector.load %arg6[%c0_9, %c0_10] : memref<2x1xf32, #tpu.memory_space<vmem>>, vector<2x1xf32>
    %18 = arith.mulf %13, %17 : vector<2x1xf32>
    %cst_11 = arith.constant dense<0.000000e+00> : vector<2xf32>
    %19 = vector.multi_reduction <add>, %16, %cst_11 [1] : vector<2x256xf32> to vector<2xf32>
    %20 = vector.shape_cast %19 : vector<2xf32> to vector<2x1xf32>
    %21 = arith.addf %18, %20 : vector<2x1xf32>
    %c0_12 = arith.constant 0 : index
    %c0_13 = arith.constant 0 : index
    %22 = vector.load %arg6[%c0_12, %c0_13] : memref<2x1xf32, #tpu.memory_space<vmem>>, vector<2x1xf32>
    tpu.vector_store %arg6[%c0_12, %c0_13], %21 {strides = array<i32>} : memref<2x1xf32, #tpu.memory_space<vmem>>, vector<2x1xf32>,
    %23 = vector.shape_cast %16 : vector<2x256xf32> to vector<2x1x256xf32>
    %24 = vector.broadcast %23 : vector<2x1x256xf32> to vector<2x4x256xf32>
    %25 = arith.mulf %3, %24 : vector<2x4x256xf32>
    %c0_14 = arith.constant 0 : index
    %c0_15 = arith.constant 0 : index
    %26 = vector.load %arg7[%c0_14, %c0_15] : memref<2x4xf32, #tpu.memory_space<vmem>>, vector<2x4xf32>
    %27 = vector.broadcast %13 : vector<2x1xf32> to vector<2x4xf32>
    %28 = arith.mulf %27, %26 : vector<2x4xf32>
    %cst_16 = arith.constant dense<0.000000e+00> : vector<2x4xf32>
    %29 = vector.multi_reduction <add>, %25, %cst_16 [2] : vector<2x4x256xf32> to vector<2x4xf32>
    %30 = arith.addf %28, %29 : vector<2x4xf32>
    %c0_17 = arith.constant 0 : index
    %c0_18 = arith.constant 0 : index
    %31 = vector.load %arg7[%c0_17, %c0_18] : memref<2x4xf32, #tpu.memory_space<vmem>>, vector<2x4xf32>
    tpu.vector_store %arg7[%c0_17, %c0_18], %30 {strides = array<i32>} : memref<2x4xf32, #tpu.memory_space<vmem>>, vector<2x4xf32>,
    %c0_19 = arith.constant 0 : index
    %c0_20 = arith.constant 0 : index
    %32 = vector.load %arg5[%c0_19, %c0_20] : memref<2x1xf32, #tpu.memory_space<vmem>>, vector<2x1xf32>
    tpu.vector_store %arg5[%c0_19, %c0_20], %11 {strides = array<i32>} : memref<2x1xf32, #tpu.memory_space<vmem>>, vector<2x1xf32>,
    %c0_i32_21 = arith.constant 0 : i32
    %33 = arith.cmpi eq, %arg1, %c0_i32_21 : i32
    %34 = arith.extui %33 : i1 to i32
    %c0_i32_22 = arith.constant 0 : i32
    %35 = arith.cmpi ne, %34, %c0_i32_22 : i32
    scf.if %35 {
      %c0_23 = arith.constant 0 : index
      %c0_24 = arith.constant 0 : index
      %36 = vector.load %arg7[%c0_23, %c0_24] : memref<2x4xf32, #tpu.memory_space<vmem>>, vector<2x4xf32>
      %c0_25 = arith.constant 0 : index
      %c0_26 = arith.constant 0 : index
      %37 = vector.load %arg6[%c0_25, %c0_26] : memref<2x1xf32, #tpu.memory_space<vmem>>, vector<2x1xf32>
      %38 = vector.broadcast %37 : vector<2x1xf32> to vector<2x4xf32>
      %39 = arith.divf %36, %38 : vector<2x4xf32>
      %c0_27 = arith.constant 0 : index
      %c0_28 = arith.constant 0 : index
      %40 = vector.load %arg4[%c0_27, %c0_28] : memref<2x4xf32, #tpu.memory_space<vmem>>, vector<2x4xf32>
      tpu.vector_store %arg4[%c0_27, %c0_28], %39 {strides = array<i32>} : memref<2x4xf32, #tpu.memory_space<vmem>>, vector<2x4xf32>,
    } else {
    }
    return
  }
  func.func @transform_0(%arg0: i32, %arg1: i32) -> (i32, i32, i32) {
    %c0_i32 = arith.constant 0 : i32
    %c0_i32_0 = arith.constant 0 : i32
    %c0_i32_1 = arith.constant 0 : i32
    %c0_i32_2 = arith.constant 0 : i32
    return %c0_i32, %c0_i32_0, %c0_i32_1 : i32, i32, i32
  }
  func.func @transform_1(%arg0: i32, %arg1: i32) -> (i32, i32, i32) {
    %c0_i32 = arith.constant 0 : i32
    %c0_i32_0 = arith.constant 0 : i32
    return %arg0, %c0_i32, %arg1 : i32, i32, i32
  }
  func.func @transform_2(%arg0: i32, %arg1: i32) -> (i32, i32) {
    %c0_i32 = arith.constant 0 : i32
    %c0_i32_0 = arith.constant 0 : i32
    return %arg0, %c0_i32 : i32, i32
  }
}

</mosaic_0001>

<llo_original>
// kernel: tpu_custom_call.1
$region0: #{tpu_custom_call.1}
  #allocation0 [shape = 'u32[]', space=smem, size = 0x4, offset = 0x4, fixed_abs, tag = 'smem constant byte address 0x4 - core index']
  #allocation1 [shape = 'u32[72,128]{1,0:T(1,128)}', space=vmem, size = 0x9000, scoped, tag = 'internal scratch']
  #allocation2 [shape = 'f32[2,1]{1,0:T(2,128)}', space=vmem, size = 0x400, scoped, tag = 'scratch operand']
  #allocation3 [shape = 'f32[2,1]{1,0:T(2,128)}', space=vmem, size = 0x400, scoped, tag = 'scratch operand']
  #allocation4 [shape = 'f32[2,4]{1,0:T(2,128)}', space=vmem, size = 0x400, scoped, tag = 'scratch operand']
  %s0 = inlined_call_operand.vmem [shape: f32[1,4,1], index: 0, kind: input, shape index: {}]
  %s1 = inlined_call_operand.hbm [shape: f32[2,4,256], index: 1, kind: input, shape index: {}]
  %s2 = inlined_call_operand.hbm [shape: f32[2,4], index: 2, kind: output, shape index: {}]
  %s3 = sld [smem:[#allocation0]]
  $region30: #{tpu_custom_call.1} parent=0
    _
  %s5 = ssub.s32 1, %s3
  %s6 = scalar_select 0, %s5, %s3
  $region1: #{tpu_custom_call.1} parent=0
    #allocation5 [shape = 'u8[8192]{0}', space=vmem, size = 0x2000, scoped, tag = 'input window, operand 1, single buffered']
    #allocation6 [shape = 's32[1]{0}', space=sflag, size = 0x4, scoped, tag = 'scoped memory for tpu_custom_call.1']
    #allocation7 [shape = 's32[1]{0}', space=sflag, size = 0x4, scoped, tag = 'scoped memory for tpu_custom_call.1']
    #allocation8 [shape = 'u8[1024]{0}', space=vmem, size = 0x400, scoped, tag = 'output window, operand 0, single buffered']
    %7 = vsyncpa [#allocation6], 0
    %8 = vsyncpa [#allocation7], 0
    // Predicated region
    $region2: #{tpu_custom_call.1} parent=1 // pred_check
      _
    $region3: #{tpu_custom_call.1} parent=1 // pred_check_branch
      %10 = sbr.rel (0) target = $region5
    $region4: #{tpu_custom_call.1} parent=1 // pred_region
      _
    $region5: #{tpu_custom_call.1} parent=1 // pred_fallthru
      _
    // Predicated region
    $region6: #{tpu_custom_call.1} parent=1 // pred_check
      _
    $region7: #{tpu_custom_call.1} parent=1 // pred_check_branch
      %12 = sbr.rel (0) target = $region9
    $region8: #{tpu_custom_call.1} parent=1 // pred_region
      %14 = vsyncadd [#allocation6], 0
      %s15 = sshll.u32 %s1, 4
      %s16 = int_to_ptr.hbm [resolvable:$true] %s15
      %s17 = sshll.u32 [#allocation5], 4
      %s18 = int_to_ptr.vmem [resolvable:$true] %s17
      %23 = dma.hbm_to_vmem [thread:$0]  %s16, 256, %s18, [#allocation6], 128, 128, 8
    $region9: #{tpu_custom_call.1} parent=1 // pred_fallthru
      _
    // Predicated region
    $region10: #{tpu_custom_call.1} parent=1 // pred_check
      _
    $region11: #{tpu_custom_call.1} parent=1 // pred_check_branch
      %25 = sbr.rel (0) target = $region13
    $region12: #{tpu_custom_call.1} parent=1 // pred_region
      %27 = dma.done [#allocation6], 256
    $region13: #{tpu_custom_call.1} parent=1 // pred_fallthru
      _
    %p28 = scmp.eq.s32.totalorder 0, 0
    // Predicated region
    $region14: #{tpu_custom_call.1} parent=1 // pred_check
      %p29 = pneg %p28
    $region15: #{tpu_custom_call.1} parent=1 // pred_check_branch
      %31 = sbr.rel (%p29) target = $region17
    $region16: #{tpu_custom_call.1} parent=1 // pred_region
      %vm32 = vcmask 1024
      %33 = vst.msk [vmem:[#allocation2] sm:$0x3] %vm32, -inf
      %34 = vst.msk [vmem:[#allocation3] sm:$0x3] %vm32, 0.0
      %vm35 = vcmask 25600
      %36 = vst.msk [vmem:[#allocation4] sm:$0x3] %vm35, 0.0
    $region17: #{tpu_custom_call.1} parent=1 // pred_fallthru
      _
    %v37 = vld [vmem:[#allocation5] sm:$0xff]
    %v38 = vld [vmem:[#allocation5 + $0x8] sm:$0xff]
    %v39 = vld [vmem:[%s0] sm:$0xf]
    %41 = vset.pattern.permute.xlu0 0
    %42 = vperm.xlu0 %41, %v39
    %v43 = vpop.permute.xlu0 %42
    %v45 = vunpack.c.l.s4 839922192
    %v46 = vunpack.c.0.s8 %v45
    %v47 = vperm.slane %v43, %v46
    %v49 = vmul.f32 %v37, %v47
    %v50 = vmul.f32 %v38, %v47
    %53 = vst [vmem:[#allocation1] ss:$2 sm:$0xff] %v49
    %v54 = vld.sshfl [vmem:[#allocation1] sm:$0xff pattern:$0x75316420]
    %v55 = vld.sshfl [vmem:[#allocation1 + $0x8] sm:$0xff pattern:$0x75316420]
    %s56 = scalar_lea.vmem [#allocation1], 16
    %57 = vst [vmem:[%s56] ss:$2 sm:$0xff] %v50
    %v58 = vld.sshfl [vmem:[#allocation1 + $0x10] sm:$0xff pattern:$0x75316420]
    %v59 = vld.sshfl [vmem:[#allocation1 + $0x18] sm:$0xff pattern:$0x75316420]
    %vm64 = vcmask 1043456
    %v65 = vsel %vm64, %v54, 0.0
    %v66 = vrot.slane %v65, 4
    %v67 = vadd.f32 %v65, %v66
    %v68 = vrot.slane %v67, 2
    %v69 = vadd.f32 %v67, %v68
    %v70 = vrot.slane %v69, 1
    %v71 = vadd.f32 %v69, %v70
    %v72 = vsel %vm64, %v55, 0.0
    %v73 = vrot.slane %v72, 4
    %v74 = vadd.f32 %v72, %v73
    %v75 = vrot.slane %v74, 2
    %v76 = vadd.f32 %v74, %v75
    %v77 = vrot.slane %v76, 1
    %v78 = vadd.f32 %v76, %v77
    %v79 = vsel %vm64, %v58, 0.0
    %v80 = vrot.slane %v79, 4
    %v81 = vadd.f32 %v79, %v80
    %v82 = vrot.slane %v81, 2
    %v83 = vadd.f32 %v81, %v82
    %v84 = vrot.slane %v83, 1
    %v85 = vadd.f32 %v83, %v84
    %v86 = vsel %vm64, %v59, 0.0
    %v87 = vrot.slane %v86, 4
    %v88 = vadd.f32 %v86, %v87
    %v89 = vrot.slane %v88, 2
    %v90 = vadd.f32 %v88, %v89
    %v91 = vrot.slane %v90, 1
    %v92 = vadd.f32 %v90, %v91
    %v93 = vld [vmem:[#allocation2] sm:$0x3]
    %vm98 = vcmask 1041409
    %v99 = vsel %vm98, %v85, %v71
    %v100 = vsel %vm98, %v92, %v78
    %vm103 = vcmask 1041408
    %v104 = vsel %vm103, %v99, -inf
    %v105 = vsel %vm103, %v100, -inf
    %v106 = vmax.f32 %v104, %v105
    %107 = vmax.xlane.f32.xlu0 %v106
    %v108 = vpop.xlane.xlu0 %107
    %v109 = vmax.f32 %v93, %v108
    %v110 = vsub.f32 %v93, %v109
    %v111 = vmul.f32 %v110, 1.442695
    %v112 = vpow.pop %v111
    %114 = vset.pattern.permute.xlu0 0
    %115 = vperm.xlu0 %114, %v109
    %v116 = vpop.permute.xlu0 %115
    %v117 = vrot.slane %v116, 1
    %v120 = vsub.f32 %v71, %v116
    %v121 = vsub.f32 %v78, %v116
    %v122 = vsub.f32 %v85, %v117
    %v123 = vsub.f32 %v92, %v117
    %v124 = vmul.f32 %v120, 1.442695
    %v125 = vpow.pop %v124
    %v126 = vmul.f32 %v121, 1.442695
    %v127 = vpow.pop %v126
    %v128 = vmul.f32 %v122, 1.442695
    %v129 = vpow.pop %v128
    %v130 = vmul.f32 %v123, 1.442695
    %v131 = vpow.pop %v130
    %v132 = vld [vmem:[#allocation3] sm:$0x3]
    %v133 = vmul.f32 %v112, %v132
    %v138 = vrot.slane %v129, 7
    %v139 = vsel %vm98, %v138, %v125
    %v140 = vrot.slane %v131, 7
    %v141 = vsel %vm98, %v140, %v127
    %v144 = vsel %vm103, %v139, 0.0
    %v145 = vsel %vm103, %v141, 0.0
    %v146 = vadd.f32 %v144, %v145
    %147 = vadd.xlane.f32.xlu0 %v146
    %v148 = vpop.xlane.xlu0 %147
    %v149 = vadd.f32 %v133, %v148
    %vm150 = vcmask 1024
    %151 = vst.msk [vmem:[#allocation3] sm:$0x3] %vm150, %v149
    %v152 = vperm.slane %v125, 0
    %v153 = vperm.slane %v127, 0
    %v154 = vperm.slane %v129, 0
    %v155 = vperm.slane %v131, 0
    %v160 = vrot.slane %v153, 4
    %v161 = vrot.slane %v155, 4
    %v162 = vsel %vm64, %v152, %v160
    %v163 = vsel %vm64, %v154, %v161
    %v166 = vmul.f32 %v37, %v162
    %v167 = vmul.f32 %v38, %v163
    %v168 = vld [vmem:[#allocation4] sm:$0x3]
    %170 = vset.pattern.permute.xlu0 0
    %171 = vperm.xlu0 %170, %v112
    %v172 = vpop.permute.xlu0 %171
    %v174 = vmul.f32 %v172, %v168
    %177 = vst [vmem:[#allocation1] ss:$2 sm:$0xff] %v166
    %v178 = vld.sshfl [vmem:[#allocation1] sm:$0xff pattern:$0x75316420]
    %v179 = vld.sshfl [vmem:[#allocation1 + $0x8] sm:$0xff pattern:$0x75316420]
    %s180 = scalar_lea.vmem [#allocation1], 16
    %181 = vst [vmem:[%s180] ss:$2 sm:$0xff] %v167
    %v182 = vld.sshfl [vmem:[#allocation1 + $0x10] sm:$0xff pattern:$0x75316420]
    %v183 = vld.sshfl [vmem:[#allocation1 + $0x18] sm:$0xff pattern:$0x75316420]
    %v188 = vsel %vm64, %v178, 0.0
    %v189 = vsel %vm64, %v179, 0.0
    %v190 = vadd.f32 %v188, %v189
    %191 = vadd.xlane.f32.xlu0 %v190
    %v192 = vpop.xlane.xlu0 %191
    %v193 = vsel %vm64, %v182, 0.0
    %v194 = vsel %vm64, %v183, 0.0
    %v195 = vadd.f32 %v193, %v194
    %196 = vadd.xlane.f32.xlu0 %v195
    %v197 = vpop.xlane.xlu0 %196
    %v200 = vlaneseq
    %v201 = vand.u32 %v200, 127
    %v202 = vperm.slane %v192, %v201
    %v203 = vperm.slane %v197, %v201
    %v204 = vsel %vm98, %v203, %v202
    %v206 = vadd.f32 %v174, %v204
    %vm207 = vcmask 25600
    %208 = vst.msk [vmem:[#allocation4] sm:$0x3] %vm207, %v206
    %209 = vst.msk [vmem:[#allocation2] sm:$0x3] %vm150, %v109
    // Predicated region
    $region18: #{tpu_custom_call.1} parent=1 // pred_check
      %p210 = pneg %p28
    $region19: #{tpu_custom_call.1} parent=1 // pred_check_branch
      %212 = sbr.rel (%p210) target = $region21
    $region20: #{tpu_custom_call.1} parent=1 // pred_region
      %v213 = vld [vmem:[#allocation4] sm:$0x3]
      %v214 = vld [vmem:[#allocation3] sm:$0x3]
      %216 = vset.pattern.permute.xlu0 0
      %217 = vperm.xlu0 %216, %v214
      %v218 = vpop.permute.xlu0 %217
      %v220 = vrcp.pop %v218
      %v221 = vmul.f32 %v218, %v220
      %v222 = vsub.f32 1.0, %v221
      %v223 = vmul.f32 %v220, %v222
      %v224 = vadd.f32 %v220, %v223
      %vm225 = vweird.f32 %v218
      %vm226 = vweird.f32 %v220
      %vm227 = vmor %vm225, %vm226
      %v228 = vsel %vm227, %v220, %v224
      %v229 = vand.u32 2147483647, %v218
      %vm230 = vcmp.eq.f32.partialorder %v229, 8.507059e+37
      %v231 = vand.u32 %v218, 2147483648
      %v232 = vor.u32 1.1754944e-38, %v231
      %v233 = vsel %vm230, %v232, %v228
      %v234 = vmul.f32 %v213, %v233
      %235 = vst.msk [vmem:[#allocation8] sm:$0x3] %vm207, %v234
    $region21: #{tpu_custom_call.1} parent=1 // pred_fallthru
      _
    // Predicated region
    $region22: #{tpu_custom_call.1} parent=1 // pred_check
      _
    $region23: #{tpu_custom_call.1} parent=1 // pred_check_branch
      %237 = sbr.rel (0) target = $region25
    $region24: #{tpu_custom_call.1} parent=1 // pred_region
      %239 = vsyncadd [#allocation7], 0
      %s241 = sshll.u32 [#allocation8], 4
      %s242 = int_to_ptr.vmem [resolvable:$true] %s241
      %s243 = sshll.u32 %s2, 4
      %s244 = int_to_ptr.hbm [resolvable:$true] %s243
      %246 = dma.vmem_to_hbm [thread:$0]  %s242, 32, %s244, [#allocation7]
    $region25: #{tpu_custom_call.1} parent=1 // pred_fallthru
      _
    // Predicated region
    $region26: #{tpu_custom_call.1} parent=1 // pred_check
      _
    $region27: #{tpu_custom_call.1} parent=1 // pred_check_branch
      %248 = sbr.rel (0) target = $region29
    $region28: #{tpu_custom_call.1} parent=1 // pred_region
      %250 = dma.done [#allocation7], 32
    $region29: #{tpu_custom_call.1} parent=1 // pred_fallthru
      _
    %251 = vsyncpa [#allocation6], 1
    %252 = vsyncpa [#allocation7], 1

</llo_original>
